<compile_context>
chip_gen: v7x
topology: tpu7x:2x2x1
jax: 0.10.0
libtpu: 0.0.40
codegen_flags: <defaults>
</compile_context>

<pallas_src>
import functools

import jax
import jax.numpy as jnp
import numpy as np
from jax import lax
from jax.experimental import pallas as pl
from jax.experimental.pallas import tpu as pltpu

EPS = 1e-5
NEG_SLOPE = 0.2

# Matmul operand dtype.  f32 keeps tight agreement with the f32 reference; on v6e/v7x
# flip to jnp.bfloat16 (MXU-native, halves operand bytes / vreg footprint), keeping
# preferred_element_type=f32 and all norm/LeakyReLU/residual math in f32.
# NOTE: with bf16 the sublane tile is 16 rows -> pad CP to a multiple of 16 first.
MATMUL_DTYPE = jnp.float32


def _round_up(x, m):
    return (x + m - 1) // m * m


def _pick_nb(N):
    """Images per grid step: batch to amortize the ~0.35us/step overhead, but keep at
    least two grid steps when possible so the batch axis still shards across v7x's
    two TensorCores."""
    if N <= 2:
        return 1
    for nb in (8, 4, 2):
        if N % nb == 0 and N // nb >= 2:
            return nb
    return 1


def _cnn_attention_kernel(x_ref, m_ref, w1_ref, w2_ref, o_ref, *, H, W, CP, Nb):
    HW = H * W
    # Flattened source offset per 3x3 tap, k = (dy+1)*3 + (dx+1).
    shifts = [dy * W + dx for dy in (-1, 0, 1) for dx in (-1, 0, 1)]

    masks = m_ref[...].astype(MATMUL_DTYPE)   # (9, HW) {0,1}, resident (constant index_map)
    w1 = w1_ref[...].astype(MATMUL_DTYPE)     # (CP, 9*CP), resident
    w2 = w2_ref[...].astype(MATMUL_DTYPE)

    def im2row(x):
        # Stack the 9 shifted+masked copies of the input along sublanes -> (9*CP, HW).
        # Rolls ride the XLU slot (otherwise idle except the norm reduces); the masks
        # zero wrap-around across row/image boundaries.
        parts = []
        for k, s in enumerate(shifts):
            xk = x if s == 0 else pltpu.roll(x, shift=(-s) % HW, axis=1)
            if k != 4:                         # centre-tap mask is all-ones
                xk = xk * masks[k:k + 1, :]
            parts.append(xk)
        return jnp.concatenate(parts, axis=0)  # 8-row (f32) aligned pieces

    def conv_norm_relu(x, w):
        # 3x3 same-conv as ONE MXU matmul with K = 9*CP, then one-pass InstanceNorm
        # stats and LeakyReLU(0.2).  Conv bias is dropped: InstanceNorm(affine=False)
        # subtracts the per-channel spatial mean, so a per-channel bias cancels exactly.
        xs = im2row(x.astype(MATMUL_DTYPE))                       # (9*CP, HW)
        y = jnp.dot(w, xs, preferred_element_type=jnp.float32)    # (CP, HW) f32
        s1 = jnp.sum(y, axis=1, keepdims=True)                    # both reduces issued
        s2 = jnp.sum(y * y, axis=1, keepdims=True)                # before normalization
        mean = s1 * (1.0 / HW)
        var = s2 * (1.0 / HW) - mean * mean
        yn = (y - mean) * lax.rsqrt(var + EPS)                    # rsqrt on the EUP
        return jnp.where(yn > 0, yn, NEG_SLOPE * yn)

    def body(i, carry):
        x_in = x_ref[i]                                           # (CP, HW) f32
        y = x_in + conv_norm_relu(x_in, w1)
        y = x_in + conv_norm_relu(y, w2)
        o_ref[i] = y
        return carry

    lax.fori_loop(0, Nb, body, 0, unroll=True)


def _stack_weights_im2row(w, C, CP):
    """PyTorch OIHW (Cout, Cin, 3, 3) -> (CP, 9*CP): column k*CP + cin holds
    w[cout, cin, kh, kw] with k = kh*3 + kw; zero padding keeps padded channels zero."""
    wk = jnp.transpose(w, (0, 2, 3, 1)).reshape(C, 9, C).astype(jnp.float32)  # (co, k, ci)
    wp = jnp.zeros((CP, 9, CP), jnp.float32).at[:C, :, :C].set(wk)
    return wp.reshape(CP, 9 * CP)


def _make_masks(H, W):
    """(9, HW) f32 boundary masks, built once on the host (no in-kernel div/mod)."""
    HW = H * W
    pos = np.arange(HW)
    hh, ww = pos // W, pos % W
    masks = np.zeros((9, HW), np.float32)
    k = 0
    for dy in (-1, 0, 1):
        for dx in (-1, 0, 1):
            ok = (hh + dy >= 0) & (hh + dy < H) & (ww + dx >= 0) & (ww + dx < W)
            masks[k] = ok.astype(np.float32)
            k += 1
    return jnp.asarray(masks)


def cnn_attention_pallas(x_nchw, w1, b1, w2, b2):
    """x_nchw: (N, C, H, W); w*: (C, C, 3, 3) PyTorch OIHW; b*: (C,).

    Biases are accepted for API parity but unused: InstanceNorm2d(affine=False)
    subtracts the per-channel spatial mean, so the conv bias cancels exactly.
    """
    del b1, b2
    N, C, H, W = x_nchw.shape
    HW = H * W
    CP = _round_up(C, 8)
    Nb = _pick_nb(N)
    assert N % Nb == 0

    # Pure reshape of contiguous NCHW + zero-pad channels to a full 8-sublane tile.
    # Padded channels stay exactly zero through conv / norm / relu / residual.
    x = x_nchw.reshape(N, C, HW).astype(jnp.float32)
    if CP != C:
        x = jnp.pad(x, ((0, 0), (0, CP - C), (0, 0)))

    w1s = _stack_weights_im2row(w1, C, CP)
    w2s = _stack_weights_im2row(w2, C, CP)
    masks = _make_masks(H, W)

    # Rough VMEM budget: double-buffered I/O image blocks + xs/conv temporaries +
    # resident weights + masks.  Keep under the scoped limit we request.
    vmem_budget = (2 * 2 * Nb * CP * HW * 4
                   + 2 * 9 * CP * HW * 4
                   + 2 * CP * 9 * CP * 4
                   + 9 * HW * 4)
    vmem_limit = 32 * 1024 * 1024
    assert vmem_budget < vmem_limit, vmem_budget

    kernel = functools.partial(_cnn_attention_kernel, H=H, W=W, CP=CP, Nb=Nb)

    out = pl.pallas_call(
        kernel,
        out_shape=jax.ShapeDtypeStruct((N, CP, HW), jnp.float32),
        grid_spec=pltpu.PrefetchScalarGridSpec(
            num_scalar_prefetch=0,
            grid=(N // Nb,),
            in_specs=[
                pl.BlockSpec((Nb, CP, HW), lambda n: (n, 0, 0)),
                pl.BlockSpec((9, HW), lambda n: (0, 0)),         # resident masks
                pl.BlockSpec((CP, 9 * CP), lambda n: (0, 0)),    # resident weights
                pl.BlockSpec((CP, 9 * CP), lambda n: (0, 0)),
            ],
            out_specs=pl.BlockSpec((Nb, CP, HW), lambda n: (n, 0, 0)),
        ),
        compiler_params=pltpu.CompilerParams(
            dimension_semantics=("parallel",),
            vmem_limit_bytes=vmem_limit),
    )(x, masks, w1s, w2s)

    return out[:, :C, :].reshape(N, C, H, W)


def _reference(x, w1, b1, w2, b2):
    """Pure-JAX reference mirroring the PyTorch forward (NCHW), bias included."""
    def conv(x, w, b):
        y = lax.conv_general_dilated(
            x, w, window_strides=(1, 1), padding="SAME",
            dimension_numbers=("NCHW", "OIHW", "NCHW"))
        return y + b[None, :, None, None]

    def inorm(x):
        m = x.mean(axis=(2, 3), keepdims=True)
        v = ((x - m) ** 2).mean(axis=(2, 3), keepdims=True)
        return (x - m) / jnp.sqrt(v + EPS)

    def lrelu(x):
        return jnp.where(x > 0, x, NEG_SLOPE * x)

    x_in = x
    y = lrelu(inorm(conv(x_in, w1, b1))) + x_in
    y = lrelu(inorm(conv(y, w2, b2))) + x_in
    return y


if __name__ == "__main__":
    key = jax.random.PRNGKey(0)
    N, C, H, W = 2, 4, 16, 16

    kx, kw1, kb1, kw2, kb2 = jax.random.split(key, 5)
    x = jax.random.normal(kx, (N, C, H, W), dtype=jnp.float32)

    # Deterministic synthetic parameters (Conv2d(C, C, 3, 3) shapes).
    fan_in = C * 3 * 3
    bound = 1.0 / np.sqrt(fan_in)
    w1 = jax.random.uniform(kw1, (C, C, 3, 3), jnp.float32, -bound, bound)
    b1 = jax.random.uniform(kb1, (C,), jnp.float32, -bound, bound)
    w2 = jax.random.uniform(kw2, (C, C, 3, 3), jnp.float32, -bound, bound)
    b2 = jax.random.uniform(kb2, (C,), jnp.float32, -bound, bound)

    out = cnn_attention_pallas(x, w1, b1, w2, b2)
    out = jax.block_until_ready(out)

    ref = jax.block_until_ready(_reference(x, w1, b1, w2, b2))
    np.testing.assert_allclose(np.asarray(out), np.asarray(ref),
                               rtol=1e-4, atol=1e-4)

    print("KERNEL_OK")
</pallas_src>

<mosaic_0001>
module attributes {stable_mosaic.version = 11 : i64} {
  func.func @_cnn_attention_kernel(%arg0: i32, %arg1: memref<1x8x256xf32, #tpu.memory_space<vmem>>, %arg2: memref<9x256xf32, #tpu.memory_space<vmem>>, %arg3: memref<8x72xf32, #tpu.memory_space<vmem>>, %arg4: memref<8x72xf32, #tpu.memory_space<vmem>>, %arg5: memref<1x8x256xf32, #tpu.memory_space<vmem>>) attributes {dimension_semantics = [#tpu.dimension_semantics<parallel>], iteration_bounds = array<i64: 2>, scalar_prefetch = 0 : i64, scratch_operands = 0 : i64, tpu.core_type = #tpu.core_type<tc>, window_params = [{transform_indices = @transform_0, window_bounds = array<i64: 1, 8, 256>}, {pipeline_mode = #tpu.pipeline_mode<synchronous>, transform_indices = @transform_1, window_bounds = array<i64: 9, 256>}, {pipeline_mode = #tpu.pipeline_mode<synchronous>, transform_indices = @transform_2, window_bounds = array<i64: 8, 72>}, {pipeline_mode = #tpu.pipeline_mode<synchronous>, transform_indices = @transform_3, window_bounds = array<i64: 8, 72>}, {transform_indices = @transform_4, window_bounds = array<i64: 1, 8, 256>}]} {
    %c0 = arith.constant 0 : index
    %c0_0 = arith.constant 0 : index
    %0 = vector.load %arg2[%c0, %c0_0] : memref<9x256xf32, #tpu.memory_space<vmem>>, vector<9x256xf32>
    %c0_1 = arith.constant 0 : index
    %c0_2 = arith.constant 0 : index
    %1 = vector.load %arg3[%c0_1, %c0_2] : memref<8x72xf32, #tpu.memory_space<vmem>>, vector<8x72xf32>
    %c0_3 = arith.constant 0 : index
    %c0_4 = arith.constant 0 : index
    %2 = vector.load %arg4[%c0_3, %c0_4] : memref<8x72xf32, #tpu.memory_space<vmem>>, vector<8x72xf32>
    %c0_i32 = arith.constant 0 : i32
    %3 = arith.index_cast %c0_i32 : i32 to index
    %c0_5 = arith.constant 0 : index
    %c0_6 = arith.constant 0 : index
    %4 = vector.load %arg1[%3, %c0_5, %c0_6] : memref<1x8x256xf32, #tpu.memory_space<vmem>>, vector<1x8x256xf32>
    %5 = vector.shape_cast %4 : vector<1x8x256xf32> to vector<8x256xf32>
    %c17_i32 = arith.constant 17 : i32
    %6 = tpu.dynamic_rotate %5 by %c17_i32 dim 1 : vector<8x256xf32>, i32 -> vector<8x256xf32>
    %7 = vector.extract_strided_slice %0 {offsets = [0, 0], sizes = [1, 256], strides = [1, 1]} : vector<9x256xf32> to vector<1x256xf32>
    %8 = vector.broadcast %7 : vector<1x256xf32> to vector<8x256xf32>
    %9 = arith.mulf %6, %8 : vector<8x256xf32>
    %c16_i32 = arith.constant 16 : i32
    %10 = tpu.dynamic_rotate %5 by %c16_i32 dim 1 : vector<8x256xf32>, i32 -> vector<8x256xf32>
    %11 = vector.extract_strided_slice %0 {offsets = [1, 0], sizes = [1, 256], strides = [1, 1]} : vector<9x256xf32> to vector<1x256xf32>
    %12 = vector.broadcast %11 : vector<1x256xf32> to vector<8x256xf32>
    %13 = arith.mulf %10, %12 : vector<8x256xf32>
    %c15_i32 = arith.constant 15 : i32
    %14 = tpu.dynamic_rotate %5 by %c15_i32 dim 1 : vector<8x256xf32>, i32 -> vector<8x256xf32>
    %15 = vector.extract_strided_slice %0 {offsets = [2, 0], sizes = [1, 256], strides = [1, 1]} : vector<9x256xf32> to vector<1x256xf32>
    %16 = vector.broadcast %15 : vector<1x256xf32> to vector<8x256xf32>
    %17 = arith.mulf %14, %16 : vector<8x256xf32>
    %c1_i32 = arith.constant 1 : i32
    %18 = tpu.dynamic_rotate %5 by %c1_i32 dim 1 : vector<8x256xf32>, i32 -> vector<8x256xf32>
    %19 = vector.extract_strided_slice %0 {offsets = [3, 0], sizes = [1, 256], strides = [1, 1]} : vector<9x256xf32> to vector<1x256xf32>
    %20 = vector.broadcast %19 : vector<1x256xf32> to vector<8x256xf32>
    %21 = arith.mulf %18, %20 : vector<8x256xf32>
    %c255_i32 = arith.constant 255 : i32
    %22 = tpu.dynamic_rotate %5 by %c255_i32 dim 1 : vector<8x256xf32>, i32 -> vector<8x256xf32>
    %23 = vector.extract_strided_slice %0 {offsets = [5, 0], sizes = [1, 256], strides = [1, 1]} : vector<9x256xf32> to vector<1x256xf32>
    %24 = vector.broadcast %23 : vector<1x256xf32> to vector<8x256xf32>
    %25 = arith.mulf %22, %24 : vector<8x256xf32>
    %c241_i32 = arith.constant 241 : i32
    %26 = tpu.dynamic_rotate %5 by %c241_i32 dim 1 : vector<8x256xf32>, i32 -> vector<8x256xf32>
    %27 = vector.extract_strided_slice %0 {offsets = [6, 0], sizes = [1, 256], strides = [1, 1]} : vector<9x256xf32> to vector<1x256xf32>
    %28 = vector.broadcast %27 : vector<1x256xf32> to vector<8x256xf32>
    %29 = arith.mulf %26, %28 : vector<8x256xf32>
    %c240_i32 = arith.constant 240 : i32
    %30 = tpu.dynamic_rotate %5 by %c240_i32 dim 1 : vector<8x256xf32>, i32 -> vector<8x256xf32>
    %31 = vector.extract_strided_slice %0 {offsets = [7, 0], sizes = [1, 256], strides = [1, 1]} : vector<9x256xf32> to vector<1x256xf32>
    %32 = vector.broadcast %31 : vector<1x256xf32> to vector<8x256xf32>
    %33 = arith.mulf %30, %32 : vector<8x256xf32>
    %c239_i32 = arith.constant 239 : i32
    %34 = tpu.dynamic_rotate %5 by %c239_i32 dim 1 : vector<8x256xf32>, i32 -> vector<8x256xf32>
    %35 = vector.extract_strided_slice %0 {offsets = [8, 0], sizes = [1, 256], strides = [1, 1]} : vector<9x256xf32> to vector<1x256xf32>
    %36 = vector.broadcast %35 : vector<1x256xf32> to vector<8x256xf32>
    %37 = arith.mulf %34, %36 : vector<8x256xf32>
    %38 = tpu.concatenate %9, %13, %17, %21, %5, %25, %29, %33, %37 in 0 : vector<8x256xf32>, vector<8x256xf32>, vector<8x256xf32>, vector<8x256xf32>, vector<8x256xf32>, vector<8x256xf32>, vector<8x256xf32>, vector<8x256xf32>, vector<8x256xf32> -> vector<72x256xf32>
    %cst = arith.constant dense<0.000000e+00> : vector<8x256xf32>
    %39 = tpu.matmul %1, %38, %cst {dimension_numbers = #tpu.dot_dimension_numbers<[1], [0], [0], [1], [0, 0, 1, 1], [], []>} : vector<8x72xf32>, vector<72x256xf32>, vector<8x256xf32> -> vector<8x256xf32>
    %cst_7 = arith.constant dense<0.000000e+00> : vector<8xf32>
    %40 = vector.multi_reduction <add>, %39, %cst_7 [1] : vector<8x256xf32> to vector<8xf32>
    %41 = vector.shape_cast %40 : vector<8xf32> to vector<8x1xf32>
    %42 = arith.mulf %39, %39 : vector<8x256xf32>
    %cst_8 = arith.constant dense<0.000000e+00> : vector<8xf32>
    %43 = vector.multi_reduction <add>, %42, %cst_8 [1] : vector<8x256xf32> to vector<8xf32>
    %44 = vector.shape_cast %43 : vector<8xf32> to vector<8x1xf32>
    %cst_9 = arith.constant 3.906250e-03 : f32
    %45 = vector.broadcast %cst_9 : f32 to vector<8x1xf32>
    %46 = arith.mulf %41, %45 : vector<8x1xf32>
    %cst_10 = arith.constant 3.906250e-03 : f32
    %47 = vector.broadcast %cst_10 : f32 to vector<8x1xf32>
    %48 = arith.mulf %44, %47 : vector<8x1xf32>
    %49 = arith.mulf %46, %46 : vector<8x1xf32>
    %50 = arith.subf %48, %49 : vector<8x1xf32>
    %51 = vector.broadcast %46 : vector<8x1xf32> to vector<8x256xf32>
    %52 = arith.subf %39, %51 : vector<8x256xf32>
    %cst_11 = arith.constant 9.99999974E-6 : f32
    %53 = vector.broadcast %cst_11 : f32 to vector<8x1xf32>
    %54 = arith.addf %50, %53 : vector<8x1xf32>
    %55 = math.rsqrt %54 : vector<8x1xf32>
    %56 = vector.broadcast %55 : vector<8x1xf32> to vector<8x256xf32>
    %57 = arith.mulf %52, %56 : vector<8x256xf32>
    %cst_12 = arith.constant 0.000000e+00 : f32
    %58 = vector.broadcast %cst_12 : f32 to vector<8x256xf32>
    %59 = arith.cmpf ogt, %57, %58 : vector<8x256xf32>
    %cst_13 = arith.constant 2.000000e-01 : f32
    %60 = vector.broadcast %cst_13 : f32 to vector<8x256xf32>
    %61 = arith.mulf %60, %57 : vector<8x256xf32>
    %62 = arith.select %59, %57, %61 : vector<8x256xi1>, vector<8x256xf32>
    %63 = arith.addf %5, %62 : vector<8x256xf32>
    %c17_i32_14 = arith.constant 17 : i32
    %64 = tpu.dynamic_rotate %63 by %c17_i32_14 dim 1 : vector<8x256xf32>, i32 -> vector<8x256xf32>
    %65 = vector.extract_strided_slice %0 {offsets = [0, 0], sizes = [1, 256], strides = [1, 1]} : vector<9x256xf32> to vector<1x256xf32>
    %66 = vector.broadcast %65 : vector<1x256xf32> to vector<8x256xf32>
    %67 = arith.mulf %64, %66 : vector<8x256xf32>
    %c16_i32_15 = arith.constant 16 : i32
    %68 = tpu.dynamic_rotate %63 by %c16_i32_15 dim 1 : vector<8x256xf32>, i32 -> vector<8x256xf32>
    %69 = vector.extract_strided_slice %0 {offsets = [1, 0], sizes = [1, 256], strides = [1, 1]} : vector<9x256xf32> to vector<1x256xf32>
    %70 = vector.broadcast %69 : vector<1x256xf32> to vector<8x256xf32>
    %71 = arith.mulf %68, %70 : vector<8x256xf32>
    %c15_i32_16 = arith.constant 15 : i32
    %72 = tpu.dynamic_rotate %63 by %c15_i32_16 dim 1 : vector<8x256xf32>, i32 -> vector<8x256xf32>
    %73 = vector.extract_strided_slice %0 {offsets = [2, 0], sizes = [1, 256], strides = [1, 1]} : vector<9x256xf32> to vector<1x256xf32>
    %74 = vector.broadcast %73 : vector<1x256xf32> to vector<8x256xf32>
    %75 = arith.mulf %72, %74 : vector<8x256xf32>
    %c1_i32_17 = arith.constant 1 : i32
    %76 = tpu.dynamic_rotate %63 by %c1_i32_17 dim 1 : vector<8x256xf32>, i32 -> vector<8x256xf32>
    %77 = vector.extract_strided_slice %0 {offsets = [3, 0], sizes = [1, 256], strides = [1, 1]} : vector<9x256xf32> to vector<1x256xf32>
    %78 = vector.broadcast %77 : vector<1x256xf32> to vector<8x256xf32>
    %79 = arith.mulf %76, %78 : vector<8x256xf32>
    %c255_i32_18 = arith.constant 255 : i32
    %80 = tpu.dynamic_rotate %63 by %c255_i32_18 dim 1 : vector<8x256xf32>, i32 -> vector<8x256xf32>
    %81 = vector.extract_strided_slice %0 {offsets = [5, 0], sizes = [1, 256], strides = [1, 1]} : vector<9x256xf32> to vector<1x256xf32>
    %82 = vector.broadcast %81 : vector<1x256xf32> to vector<8x256xf32>
    %83 = arith.mulf %80, %82 : vector<8x256xf32>
    %c241_i32_19 = arith.constant 241 : i32
    %84 = tpu.dynamic_rotate %63 by %c241_i32_19 dim 1 : vector<8x256xf32>, i32 -> vector<8x256xf32>
    %85 = vector.extract_strided_slice %0 {offsets = [6, 0], sizes = [1, 256], strides = [1, 1]} : vector<9x256xf32> to vector<1x256xf32>
    %86 = vector.broadcast %85 : vector<1x256xf32> to vector<8x256xf32>
    %87 = arith.mulf %84, %86 : vector<8x256xf32>
    %c240_i32_20 = arith.constant 240 : i32
    %88 = tpu.dynamic_rotate %63 by %c240_i32_20 dim 1 : vector<8x256xf32>, i32 -> vector<8x256xf32>
    %89 = vector.extract_strided_slice %0 {offsets = [7, 0], sizes = [1, 256], strides = [1, 1]} : vector<9x256xf32> to vector<1x256xf32>
    %90 = vector.broadcast %89 : vector<1x256xf32> to vector<8x256xf32>
    %91 = arith.mulf %88, %90 : vector<8x256xf32>
    %c239_i32_21 = arith.constant 239 : i32
    %92 = tpu.dynamic_rotate %63 by %c239_i32_21 dim 1 : vector<8x256xf32>, i32 -> vector<8x256xf32>
    %93 = vector.extract_strided_slice %0 {offsets = [8, 0], sizes = [1, 256], strides = [1, 1]} : vector<9x256xf32> to vector<1x256xf32>
    %94 = vector.broadcast %93 : vector<1x256xf32> to vector<8x256xf32>
    %95 = arith.mulf %92, %94 : vector<8x256xf32>
    %96 = tpu.concatenate %67, %71, %75, %79, %63, %83, %87, %91, %95 in 0 : vector<8x256xf32>, vector<8x256xf32>, vector<8x256xf32>, vector<8x256xf32>, vector<8x256xf32>, vector<8x256xf32>, vector<8x256xf32>, vector<8x256xf32>, vector<8x256xf32> -> vector<72x256xf32>
    %cst_22 = arith.constant dense<0.000000e+00> : vector<8x256xf32>
    %97 = tpu.matmul %2, %96, %cst_22 {dimension_numbers = #tpu.dot_dimension_numbers<[1], [0], [0], [1], [0, 0, 1, 1], [], []>} : vector<8x72xf32>, vector<72x256xf32>, vector<8x256xf32> -> vector<8x256xf32>
    %cst_23 = arith.constant dense<0.000000e+00> : vector<8xf32>
    %98 = vector.multi_reduction <add>, %97, %cst_23 [1] : vector<8x256xf32> to vector<8xf32>
    %99 = vector.shape_cast %98 : vector<8xf32> to vector<8x1xf32>
    %100 = arith.mulf %97, %97 : vector<8x256xf32>
    %cst_24 = arith.constant dense<0.000000e+00> : vector<8xf32>
    %101 = vector.multi_reduction <add>, %100, %cst_24 [1] : vector<8x256xf32> to vector<8xf32>
    %102 = vector.shape_cast %101 : vector<8xf32> to vector<8x1xf32>
    %cst_25 = arith.constant 3.906250e-03 : f32
    %103 = vector.broadcast %cst_25 : f32 to vector<8x1xf32>
    %104 = arith.mulf %99, %103 : vector<8x1xf32>
    %cst_26 = arith.constant 3.906250e-03 : f32
    %105 = vector.broadcast %cst_26 : f32 to vector<8x1xf32>
    %106 = arith.mulf %102, %105 : vector<8x1xf32>
    %107 = arith.mulf %104, %104 : vector<8x1xf32>
    %108 = arith.subf %106, %107 : vector<8x1xf32>
    %109 = vector.broadcast %104 : vector<8x1xf32> to vector<8x256xf32>
    %110 = arith.subf %97, %109 : vector<8x256xf32>
    %cst_27 = arith.constant 9.99999974E-6 : f32
    %111 = vector.broadcast %cst_27 : f32 to vector<8x1xf32>
    %112 = arith.addf %108, %111 : vector<8x1xf32>
    %113 = math.rsqrt %112 : vector<8x1xf32>
    %114 = vector.broadcast %113 : vector<8x1xf32> to vector<8x256xf32>
    %115 = arith.mulf %110, %114 : vector<8x256xf32>
    %cst_28 = arith.constant 0.000000e+00 : f32
    %116 = vector.broadcast %cst_28 : f32 to vector<8x256xf32>
    %117 = arith.cmpf ogt, %115, %116 : vector<8x256xf32>
    %cst_29 = arith.constant 2.000000e-01 : f32
    %118 = vector.broadcast %cst_29 : f32 to vector<8x256xf32>
    %119 = arith.mulf %118, %115 : vector<8x256xf32>
    %120 = arith.select %117, %115, %119 : vector<8x256xi1>, vector<8x256xf32>
    %121 = arith.addf %5, %120 : vector<8x256xf32>
    %122 = arith.index_cast %c0_i32 : i32 to index
    %c0_30 = arith.constant 0 : index
    %c0_31 = arith.constant 0 : index
    %123 = vector.load %arg5[%122, %c0_30, %c0_31] : memref<1x8x256xf32, #tpu.memory_space<vmem>>, vector<1x8x256xf32>
    %124 = vector.shape_cast %123 : vector<1x8x256xf32> to vector<8x256xf32>
    %125 = vector.shape_cast %121 : vector<8x256xf32> to vector<1x8x256xf32>
    tpu.vector_store %arg5[%122, %c0_30, %c0_31], %125 {strides = array<i32>} : memref<1x8x256xf32, #tpu.memory_space<vmem>>, vector<1x8x256xf32>,
    %c1_i32_32 = arith.constant 1 : i32
    return
  }
  func.func @transform_0(%arg0: i32) -> (i32, i32, i32) {
    %c0_i32 = arith.constant 0 : i32
    %c0_i32_0 = arith.constant 0 : i32
    %c0_i32_1 = arith.constant 0 : i32
    return %arg0, %c0_i32, %c0_i32_0 : i32, i32, i32
  }
  func.func @transform_1(%arg0: i32) -> (i32, i32) {
    %c0_i32 = arith.constant 0 : i32
    %c0_i32_0 = arith.constant 0 : i32
    %c0_i32_1 = arith.constant 0 : i32
    return %c0_i32, %c0_i32_0 : i32, i32
  }
  func.func @transform_2(%arg0: i32) -> (i32, i32) {
    %c0_i32 = arith.constant 0 : i32
    %c0_i32_0 = arith.constant 0 : i32
    %c0_i32_1 = arith.constant 0 : i32
    return %c0_i32, %c0_i32_0 : i32, i32
  }
  func.func @transform_3(%arg0: i32) -> (i32, i32) {
    %c0_i32 = arith.constant 0 : i32
    %c0_i32_0 = arith.constant 0 : i32
    %c0_i32_1 = arith.constant 0 : i32
    return %c0_i32, %c0_i32_0 : i32, i32
  }
  func.func @transform_4(%arg0: i32) -> (i32, i32, i32) {
    %c0_i32 = arith.constant 0 : i32
    %c0_i32_0 = arith.constant 0 : i32
    %c0_i32_1 = arith.constant 0 : i32
    return %arg0, %c0_i32, %c0_i32_0 : i32, i32, i32
  }
}

</mosaic_0001>

<llo_original>
// kernel: tpu_custom_call.1
$region0: #{tpu_custom_call.1}
  #allocation0 [shape = 'u32[]', space=smem, size = 0x4, offset = 0x4, fixed_abs, tag = 'smem constant byte address 0x4 - core index']
  #allocation1 [shape = 'u32[144,128]{1,0:T(1,128)}', space=vmem, size = 0x12000, scoped, tag = 'internal scratch']
  %s0 = inlined_call_operand.hbm [shape: f32[2,8,256], index: 0, kind: input, shape index: {}]
  %s1 = inlined_call_operand.hbm [shape: f32[9,256], index: 1, kind: input, shape index: {}]
  %s2 = inlined_call_operand.hbm [shape: f32[8,72], index: 2, kind: input, shape index: {}]
  %s3 = inlined_call_operand.vmem [shape: f32[8,72], index: 3, kind: input, shape index: {}]
  %s4 = inlined_call_operand.hbm [shape: f32[2,8,256], index: 4, kind: output, shape index: {}]
  %s5 = sld [smem:[#allocation0]]
  $region61: #{tpu_custom_call.1} parent=0
    _
  %s7 = ssub.s32 1, %s5
  %s8 = scalar_select 0, %s7, %s5
  $region1: #{tpu_custom_call.1} parent=0
    #allocation2 [shape = 'u8[16384]{0}', space=vmem, size = 0x4000, scoped, tag = 'input window, operand 0']
    #allocation3 [shape = 's32[2]{0}', space=sflag, size = 0x8, scoped, tag = 'scoped memory for tpu_custom_call.1']
    #allocation4 [shape = 's32[2]{0}', space=sflag, size = 0x8, scoped, tag = 'scoped memory for tpu_custom_call.1']
    #allocation5 [shape = 'u8[16384]{0}', space=vmem, size = 0x4000, scoped, tag = 'input window, operand 1, single buffered']
    #allocation6 [shape = 's32[1]{0}', space=sflag, size = 0x4, scoped, tag = 'scoped memory for tpu_custom_call.1']
    #allocation7 [shape = 'u8[4096]{0}', space=vmem, size = 0x1000, scoped, tag = 'input window, operand 2, single buffered']
    #allocation8 [shape = 'u8[16384]{0}', space=vmem, size = 0x4000, scoped, tag = 'output window, operand 0']
    %9 = vsyncpa [#allocation3], 0
    %s10 = scalar_lea.sflag [#allocation3], 1
    %11 = vsyncpa %s10, 0
    %12 = vsyncpa [#allocation6], 0
    %13 = vsyncpa [#allocation4], 0
    %s14 = scalar_lea.sflag [#allocation4], 1
    %15 = vsyncpa %s14, 0
    loop: start=0, step=1, limit=4
    $region2: #{tpu_custom_call.1} parent=1 // loop_pre_header
      _
    $region3: #{tpu_custom_call.1} parent=1 // loop_header
      %s17 = sphi 0, %s21
      %p18 = scmp.ge.s32.totalorder %s17, 4
      %s27 = sphi 0, %s29
      %s30 = sphi 0, %s27
      %s31 = sphi 0, %s30
      %s47 = sphi 0, %s31
      %s51 = sphi 0, %s51
      %s53 = sphi 0, %s51
      %s54 = sphi 0, %s53
      %s68 = sphi 0, %s54
      %s72 = sphi 0, %s72
      %s74 = sphi 0, %s72
      %s75 = sphi 0, %s74
      %s89 = sphi 0, %s75
      %s93 = sphi 0, %s93
      %s95 = sphi 0, %s93
      %s96 = sphi 0, %s95
      %s110 = sphi 0, %s96
      %s116 = sphi 0, %s118
      %s119 = sphi 0, %s116
      %s120 = sphi 0, %s119
      %s136 = sphi 0, %s120
    $region4: #{tpu_custom_call.1} parent=1 // loop_header_branch
      %20 = sbr.rel (%p18) target = $region8
    $region5: #{tpu_custom_call.1} parent=1 // loop_body
      %s22 = ssub.s32 %s17, 1
      %s23 = ssub.s32 %s17, 2
      %s24 = sadd.s32 %s17, 1
      %s25 = ssub.s32 %s17, %s24
      %p26 = scmp.eq.s32.totalorder %s25, 0
      %s28 = sadd.s32 %s27, 1
      %s29 = scalar_select %p26, %s27, %s28
      %p32 = pneg %p26
      %p33 = scmp.eq.s32.totalorder %s17, 1
      %p34 = por %p32, %p33
      %p35 = scmp.ne.s32.totalorder %s27, %s30
      %p36 = scmp.eq.s32.totalorder %s17, 0
      %p37 = por %p35, %p36
      %p38 = scmp.ne.s32.totalorder %s27, %s30
      %p39 = scmp.eq.s32.totalorder %s22, 1
      %p40 = por %p38, %p39
      %p41 = scmp.ne.s32.totalorder %s30, %s31
      %p42 = scmp.eq.s32.totalorder %s22, 0
      %p43 = por %p41, %p42
      %p44 = scmp.ne.s32.totalorder %s30, %s31
      %p45 = scmp.eq.s32.totalorder %s23, 1
      %p46 = por %p44, %p45
      %p48 = scmp.ne.s32.totalorder %s31, %s47
      %p49 = scmp.eq.s32.totalorder %s23, 0
      %p50 = por %p48, %p49
      %s52 = sadd.s32 %s51, 1
      %p55 = scmp.eq.s32.totalorder %s17, 1
      %p56 = scmp.ne.s32.totalorder %s51, %s53
      %p57 = scmp.eq.s32.totalorder %s17, 0
      %p58 = por %p56, %p57
      %p59 = scmp.ne.s32.totalorder %s51, %s53
      %p60 = scmp.eq.s32.totalorder %s22, 1
      %p61 = por %p59, %p60
      %p62 = scmp.ne.s32.totalorder %s53, %s54
      %p63 = scmp.eq.s32.totalorder %s22, 0
      %p64 = por %p62, %p63
      %p65 = scmp.ne.s32.totalorder %s53, %s54
      %p66 = scmp.eq.s32.totalorder %s23, 1
      %p67 = por %p65, %p66
      %p69 = scmp.ne.s32.totalorder %s54, %s68
      %p70 = scmp.eq.s32.totalorder %s23, 0
      %p71 = por %p69, %p70
      %s73 = sadd.s32 %s72, 1
      %p76 = scmp.eq.s32.totalorder %s17, 1
      %p77 = scmp.ne.s32.totalorder %s72, %s74
      %p78 = scmp.eq.s32.totalorder %s17, 0
      %p79 = por %p77, %p78
      %p80 = scmp.ne.s32.totalorder %s72, %s74
      %p81 = scmp.eq.s32.totalorder %s22, 1
      %p82 = por %p80, %p81
      %p83 = scmp.ne.s32.totalorder %s74, %s75
      %p84 = scmp.eq.s32.totalorder %s22, 0
      %p85 = por %p83, %p84
      %p86 = scmp.ne.s32.totalorder %s74, %s75
      %p87 = scmp.eq.s32.totalorder %s23, 1
      %p88 = por %p86, %p87
      %p90 = scmp.ne.s32.totalorder %s75, %s89
      %p91 = scmp.eq.s32.totalorder %s23, 0
      %p92 = por %p90, %p91
      %s94 = sadd.s32 %s93, 1
      %p97 = scmp.eq.s32.totalorder %s17, 1
      %p98 = scmp.ne.s32.totalorder %s93, %s95
      %p99 = scmp.eq.s32.totalorder %s17, 0
      %p100 = por %p98, %p99
      %p101 = scmp.ne.s32.totalorder %s93, %s95
      %p102 = scmp.eq.s32.totalorder %s22, 1
      %p103 = por %p101, %p102
      %p104 = scmp.ne.s32.totalorder %s95, %s96
      %p105 = scmp.eq.s32.totalorder %s22, 0
      %p106 = por %p104, %p105
      %p107 = scmp.ne.s32.totalorder %s95, %s96
      %p108 = scmp.eq.s32.totalorder %s23, 1
      %p109 = por %p107, %p108
      %p111 = scmp.ne.s32.totalorder %s96, %s110
      %p112 = scmp.eq.s32.totalorder %s23, 0
      %p113 = por %p111, %p112
      %s114 = ssub.s32 %s17, %s24
      %p115 = scmp.eq.s32.totalorder %s114, 0
      %s117 = sadd.s32 %s116, 1
      %s118 = scalar_select %p115, %s116, %s117
      %p121 = pneg %p115
      %p122 = scmp.eq.s32.totalorder %s17, 1
      %p123 = por %p121, %p122
      %p124 = scmp.ne.s32.totalorder %s116, %s119
      %p125 = scmp.eq.s32.totalorder %s17, 0
      %p126 = por %p124, %p125
      %p127 = scmp.ne.s32.totalorder %s116, %s119
      %p128 = scmp.eq.s32.totalorder %s22, 1
      %p129 = por %p127, %p128
      %p130 = scmp.ne.s32.totalorder %s119, %s120
      %p131 = scmp.eq.s32.totalorder %s22, 0
      %p132 = por %p130, %p131
      %p133 = scmp.ne.s32.totalorder %s119, %s120
      %p134 = scmp.eq.s32.totalorder %s23, 1
      %p135 = por %p133, %p134
      %p137 = scmp.ne.s32.totalorder %s120, %s136
      %p138 = scmp.eq.s32.totalorder %s23, 0
      %p139 = por %p137, %p138
      %p140 = scmp.le.s32.totalorder 1, %s17
      %p141 = scmp.lt.s32.totalorder %s17, 3
      %p142 = pnand %p140, %p141
      %p143 = pneg %p142
      // Predicated region
      $region9: #{tpu_custom_call.1} parent=5 // pred_check
        _
      $region10: #{tpu_custom_call.1} parent=5 // pred_check_branch
        %145 = sbr.rel (%p142) target = $region12
      $region11: #{tpu_custom_call.1} parent=5 // pred_region
        %s146 = ssub.s32 %s17, 1
        // Predicated region
        $region13: #{tpu_custom_call.1} parent=11 // pred_check
          %p147 = pneg %p64
        $region14: #{tpu_custom_call.1} parent=11 // pred_check_branch
          %149 = sbr.rel (%p147) target = $region16
        $region15: #{tpu_custom_call.1} parent=11 // pred_region
          %s151 = ssub.s32 512, 512
          %152 = vsyncadd [#allocation6], %s151
          %s153 = sshll.u32 [#allocation5], 4
          %s154 = int_to_ptr.vmem [resolvable:$true] %s153
          %159 = dma.hbm_to_vmem [thread:$0]  %s1, 512, %s154, [#allocation6], 256, 256, 16
        $region16: #{tpu_custom_call.1} parent=11 // pred_fallthru
          _
        // Predicated region
        $region17: #{tpu_custom_call.1} parent=11 // pred_check
          %p160 = pneg %p85
        $region18: #{tpu_custom_call.1} parent=11 // pred_check_branch
          %162 = sbr.rel (%p160) target = $region20
        $region19: #{tpu_custom_call.1} parent=11 // pred_region
          %s164 = ssub.s32 128, 128
          %165 = vsyncadd [#allocation6], %s164
          %s167 = sshll.u32 [#allocation7], 4
          %s168 = int_to_ptr.vmem [resolvable:$true] %s167
          %170 = dma.hbm_to_vmem [thread:$0]  %s2, 128, %s168, [#allocation6]
        $region20: #{tpu_custom_call.1} parent=11 // pred_fallthru
          _
        // Predicated region
        $region21: #{tpu_custom_call.1} parent=11 // pred_check
          %p171 = pneg %p106
        $region22: #{tpu_custom_call.1} parent=11 // pred_check_branch
          %173 = sbr.rel (%p171) target = $region24
        $region23: #{tpu_custom_call.1} parent=11 // pred_region
          _
        $region24: #{tpu_custom_call.1} parent=11 // pred_fallthru
          _
      $region12: #{tpu_custom_call.1} parent=5 // pred_fallthru
        _
      %p174 = scmp.lt.s32.totalorder %s17, 2
      // Predicated region
      $region25: #{tpu_custom_call.1} parent=5 // pred_check
        %p175 = pneg %p174
      $region26: #{tpu_custom_call.1} parent=5 // pred_check_branch
        %177 = sbr.rel (%p175) target = $region28
      $region27: #{tpu_custom_call.1} parent=5 // pred_region
        // Predicated region
        $region29: #{tpu_custom_call.1} parent=27 // pred_check
          %p178 = pneg %p37
        $region30: #{tpu_custom_call.1} parent=27 // pred_check_branch
          %180 = sbr.rel (%p178) target = $region32
        $region31: #{tpu_custom_call.1} parent=27 // pred_region
          %s181 = sand.u32 %s27, 1
          %s182 = scalar_lea.sflag [#allocation3], %s181
          %s183 = sand.u32 %s27, 1
          %s184 = smul.addr %s183, 16
          %s185 = scalar_lea.vmem [#allocation2], %s184
          %s187 = ssub.s32 256, 256
          %188 = vsyncadd %s182, %s187
          %s189 = smul.addr %s17, 2
          %s190 = smul.addr %s189, 128
          %s191 = scalar_lea.hbm %s0, %s190
          %s193 = sshll.u32 %s185, 4
          %s194 = int_to_ptr.vmem [resolvable:$true] %s193
          %196 = dma.hbm_to_vmem [thread:$0]  %s191, 256, %s194, %s182
        $region32: #{tpu_custom_call.1} parent=27 // pred_fallthru
          _
      $region28: #{tpu_custom_call.1} parent=5 // pred_fallthru
        _
      %p197 = scmp.le.s32.totalorder 1, %s17
      %p198 = scmp.lt.s32.totalorder %s17, 3
      %p199 = pnand %p197, %p198
      %p200 = pneg %p199
      // Predicated region
      $region33: #{tpu_custom_call.1} parent=5 // pred_check
        _
      $region34: #{tpu_custom_call.1} parent=5 // pred_check_branch
        %202 = sbr.rel (%p199) target = $region36
      $region35: #{tpu_custom_call.1} parent=5 // pred_region
        %s203 = ssub.s32 %s17, 1
        %s204 = sand.u32 %s30, 1
        %s205 = scalar_lea.sflag [#allocation3], %s204
        %s206 = sand.u32 %s30, 1
        %s207 = smul.addr %s206, 16
        %s208 = scalar_lea.vmem [#allocation2], %s207
        // Predicated region
        $region37: #{tpu_custom_call.1} parent=35 // pred_check
          %p209 = pneg %p43
        $region38: #{tpu_custom_call.1} parent=35 // pred_check_branch
          %211 = sbr.rel (%p209) target = $region40
        $region39: #{tpu_custom_call.1} parent=35 // pred_region
          %212 = dma.done %s205, 256
        $region40: #{tpu_custom_call.1} parent=35 // pred_fallthru
          _
        // Predicated region
        $region41: #{tpu_custom_call.1} parent=35 // pred_check
          %p213 = pneg %p64
        $region42: #{tpu_custom_call.1} parent=35 // pred_check_branch
          %215 = sbr.rel (%p213) target = $region44
        $region43: #{tpu_custom_call.1} parent=35 // pred_region
          %216 = dma.done [#allocation6], 512
        $region44: #{tpu_custom_call.1} parent=35 // pred_fallthru
          _
        // Predicated region
        $region45: #{tpu_custom_call.1} parent=35 // pred_check
          %p217 = pneg %p85
        $region46: #{tpu_custom_call.1} parent=35 // pred_check_branch
          %219 = sbr.rel (%p217) target = $region48
        $region47: #{tpu_custom_call.1} parent=35 // pred_region
          %220 = dma.done [#allocation6], 128
        $region48: #{tpu_custom_call.1} parent=35 // pred_fallthru
          _
        %s221 = sand.u32 %s30, 1
        %s222 = scalar_lea.sflag [#allocation3], %s221
        %s223 = sand.u32 %s30, 1
        %s224 = smul.addr %s223, 16
        %s225 = scalar_lea.vmem [#allocation2], %s224
        %p226 = pneg %p43
        %p227 = pneg %p40
        %p228 = pneg %p64
        %p229 = pneg %p61
        %p230 = pneg %p85
        %p231 = pneg %p82
        %p232 = pneg %p106
        %p233 = pneg %p103
        %p234 = pneg %p132
        %p235 = pneg %p129
        %s236 = sand.u32 %s119, 1
        %s237 = scalar_lea.sflag [#allocation4], %s236
        %s238 = sand.u32 %s119, 1
        %s239 = smul.addr %s238, 16
        %s240 = scalar_lea.vmem [#allocation8], %s239
        %v241 = vld [vmem:[#allocation5] sm:$0xff]
        %v242 = vld [vmem:[#allocation5 + $0x8] sm:$0xff]
        %v243 = vld [vmem:[#allocation5 + $0x10] sm:$0x1]
        %v244 = vld [vmem:[#allocation5 + $0x18] sm:$0x1]
        %v245 = vld [vmem:[#allocation7] sm:$0xff]
        %v246 = vld [vmem:[%s3] sm:$0xff]
        %v247 = vld [vmem:[%s208] sm:$0xff]
        %v248 = vld [vmem:[%s208 + $0x8] sm:$0xff]
        %249 = vrot.lane.b32.xlu0 %v247, 17
        %v250 = vpop.permute.xlu0 %249
        %251 = vrot.lane.b32.xlu0 %v248, 17
        %v252 = vpop.permute.xlu0 %251
        %v253 = vlaneseq
        %v254 = vand.u32 %v253, 127
        %vm255 = vcmp.lt.s32.totalorder %v254, 17
        %v256 = vsel %vm255, %v250, %v252
        %v257 = vsel %vm255, %v252, %v250
        %v258 = vlaneseq
        %v259 = vshrl.u32 %v258, 7
        %v260 = vsub.s32 0, %v259
        %v261 = vrot.slane %v241, %v260
        %v262 = vlaneseq
        %v263 = vshrl.u32 %v262, 7
        %v264 = vsub.s32 0, %v263
        %v265 = vrot.slane %v242, %v264
        %v266 = vmul.f32 %v257, %v261
        %v267 = vmul.f32 %v256, %v265
        %268 = vrot.lane.b32.xlu0 %v247, 16
        %v269 = vpop.permute.xlu0 %268
        %270 = vrot.lane.b32.xlu0 %v248, 16
        %v271 = vpop.permute.xlu0 %270
        %vm272 = vcmp.lt.s32.totalorder %v254, 16
        %v273 = vsel %vm272, %v269, %v271
        %v274 = vsel %vm272, %v271, %v269
        %v275 = vlaneseq
        %v276 = vshrl.u32 %v275, 7
        %v277 = vsub.s32 1, %v276
        %v278 = vrot.slane %v241, %v277
        %v279 = vlaneseq
        %v280 = vshrl.u32 %v279, 7
        %v281 = vsub.s32 1, %v280
        %v282 = vrot.slane %v242, %v281
        %v283 = vmul.f32 %v274, %v278
        %v284 = vmul.f32 %v273, %v282
        %285 = vrot.lane.b32.xlu0 %v247, 15
        %v286 = vpop.permute.xlu0 %285
        %287 = vrot.lane.b32.xlu0 %v248, 15
        %v288 = vpop.permute.xlu0 %287
        %vm289 = vcmp.lt.s32.totalorder %v254, 15
        %v290 = vsel %vm289, %v286, %v288
        %v291 = vsel %vm289, %v288, %v286
        %v292 = vlaneseq
        %v293 = vshrl.u32 %v292, 7
        %v294 = vsub.s32 2, %v293
        %v295 = vrot.slane %v241, %v294
        %v296 = vlaneseq
        %v297 = vshrl.u32 %v296, 7
        %v298 = vsub.s32 2, %v297
        %v299 = vrot.slane %v242, %v298
        %v300 = vmul.f32 %v291, %v295
        %v301 = vmul.f32 %v290, %v299
        %302 = vrot.lane.b32.xlu0 %v247, 1
        %v303 = vpop.permute.xlu0 %302
        %304 = vrot.lane.b32.xlu0 %v248, 1
        %v305 = vpop.permute.xlu0 %304
        %vm306 = vcmp.lt.s32.totalorder %v254, 1
        %v307 = vsel %vm306, %v303, %v305
        %v308 = vsel %vm306, %v305, %v303
        %v309 = vlaneseq
        %v310 = vshrl.u32 %v309, 7
        %v311 = vsub.s32 3, %v310
        %v312 = vrot.slane %v241, %v311
        %v313 = vlaneseq
        %v314 = vshrl.u32 %v313, 7
        %v315 = vsub.s32 3, %v314
        %v316 = vrot.slane %v242, %v315
        %v317 = vmul.f32 %v308, %v312
        %v318 = vmul.f32 %v307, %v316
        %319 = vrot.lane.b32.xlu0 %v247, 127
        %v320 = vpop.permute.xlu0 %319
        %321 = vrot.lane.b32.xlu0 %v248, 127
        %v322 = vpop.permute.xlu0 %321
        %vm323 = vcmp.lt.s32.totalorder %v254, 127
        %v324 = vsel %vm323, %v320, %v322
        %v325 = vsel %vm323, %v322, %v320
        %v326 = vlaneseq
        %v327 = vshrl.u32 %v326, 7
        %v328 = vsub.s32 5, %v327
        %v329 = vrot.slane %v241, %v328
        %v330 = vlaneseq
        %v331 = vshrl.u32 %v330, 7
        %v332 = vsub.s32 5, %v331
        %v333 = vrot.slane %v242, %v332
        %v334 = vmul.f32 %v324, %v329
        %v335 = vmul.f32 %v325, %v333
        %336 = vrot.lane.b32.xlu0 %v247, 113
        %v337 = vpop.permute.xlu0 %336
        %338 = vrot.lane.b32.xlu0 %v248, 113
        %v339 = vpop.permute.xlu0 %338
        %vm340 = vcmp.lt.s32.totalorder %v254, 113
        %v341 = vsel %vm340, %v337, %v339
        %v342 = vsel %vm340, %v339, %v337
        %v343 = vlaneseq
        %v344 = vshrl.u32 %v343, 7
        %v345 = vsub.s32 6, %v344
        %v346 = vrot.slane %v241, %v345
        %v347 = vlaneseq
        %v348 = vshrl.u32 %v347, 7
        %v349 = vsub.s32 6, %v348
        %v350 = vrot.slane %v242, %v349
        %v351 = vmul.f32 %v341, %v346
        %v352 = vmul.f32 %v342, %v350
        %353 = vrot.lane.b32.xlu0 %v247, 112
        %v354 = vpop.permute.xlu0 %353
        %355 = vrot.lane.b32.xlu0 %v248, 112
        %v356 = vpop.permute.xlu0 %355
        %vm357 = vcmp.lt.s32.totalorder %v254, 112
        %v358 = vsel %vm357, %v354, %v356
        %v359 = vsel %vm357, %v356, %v354
        %v360 = vlaneseq
        %v361 = vshrl.u32 %v360, 7
        %v362 = vsub.s32 7, %v361
        %v363 = vrot.slane %v241, %v362
        %v364 = vlaneseq
        %v365 = vshrl.u32 %v364, 7
        %v366 = vsub.s32 7, %v365
        %v367 = vrot.slane %v242, %v366
        %v368 = vmul.f32 %v358, %v363
        %v369 = vmul.f32 %v359, %v367
        %370 = vrot.lane.b32.xlu0 %v247, 111
        %v371 = vpop.permute.xlu0 %370
        %372 = vrot.lane.b32.xlu0 %v248, 111
        %v373 = vpop.permute.xlu0 %372
        %vm374 = vcmp.lt.s32.totalorder %v254, 111
        %v375 = vsel %vm374, %v371, %v373
        %v376 = vsel %vm374, %v373, %v371
        %v377 = vlaneseq
        %v378 = vshrl.u32 %v377, 7
        %v379 = vsub.s32 0, %v378
        %v380 = vrot.slane %v243, %v379
        %v381 = vlaneseq
        %v382 = vshrl.u32 %v381, 7
        %v383 = vsub.s32 0, %v382
        %v384 = vrot.slane %v244, %v383
        %v385 = vmul.f32 %v375, %v380
        %v386 = vmul.f32 %v376, %v384
        %vm387 = vcmask 588800
        %v389 = vsel %vm387, %v245, 0
        %391 = vmatprep.subr.mxu0 %v267
        %392 = vmatpush1.msra.mxu0 %v266
        %393 = vmatprep.subr.mxu0 %v284
        %394 = vmatpush1.msra.mxu0 %v283
        %395 = vmatprep.subr.mxu0 %v301
        %396 = vmatpush1.msra.mxu0 %v300
        %397 = vmatprep.subr.mxu0 %v318
        %398 = vmatpush1.msra.mxu0 %v317
        %399 = vmatprep.subr.mxu0 %v248
        %400 = vmatpush1.msra.mxu0 %v247
        %401 = vmatprep.subr.mxu0 %v335
        %402 = vmatpush1.msra.mxu0 %v334
        %403 = vmatprep.subr.mxu0 %v352
        %404 = vmatpush1.msra.mxu0 %v351
        %405 = vmatprep.subr.mxu0 %v369
        %406 = vmatpush1.msra.mxu0 %v368
        %407 = vmatprep.subr.mxu0 %v386
        %408 = vmatpush1.msra.mxu0 %v385
        %409 = vmatprep.subr.mxu0 0.0
        %410 = vmatpush1.msra.mxu0 0.0
        %411 = vmatprep.subr.mxu0 0.0
        %412 = vmatpush1.msra.mxu0 0.0
        %413 = vmatprep.subr.mxu0 0.0
        %414 = vmatpush1.msra.mxu0 0.0
        %415 = vmatprep.subr.mxu0 0.0
        %416 = vmatpush1.msra.mxu0 0.0
        %417 = vmatprep.subr.mxu0 0.0
        %418 = vmatpush1.msra.mxu0 0.0
        %419 = vmatprep.subr.mxu0 0.0
        %420 = vmatpush1.msra.mxu0 0.0
        %421 = vmatprep.subr.mxu0 0.0
        %422 = vmatpush1.msra.mxu0 0.0
        %423 = vmatprep.subr.mxu0 0.0
        %424 = vmatpush1.msra.mxu0 0.0
        %425 = vmatprep.subr.mxu0 0.0
        %426 = vmatpush1.msra.mxu0 0.0
        %427 = vmatprep.subr.mxu0 0.0
        %428 = vmatpush1.msra.mxu0 0.0
        %429 = vmatprep.subr.mxu0 0.0
        %430 = vmatpush1.msra.mxu0 0.0
        %431 = vmatprep.subr.mxu0 0.0
        %432 = vmatpush1.msra.mxu0 0.0
        %433 = vmatprep.subr.mxu0 0.0
        %434 = vmatpush1.msra.mxu0 0.0
        %435 = vmatprep.subr.mxu0 0.0
        %436 = vmatpush1.msra.mxu0 0.0
        %437 = vmatprep.subr.mxu0 0.0
        %438 = vmatpush1.msra.mxu0 0.0
        %439 = vmatprep.subr.mxu0 0.0
        %440 = vmatpush1.msra.mxu0 0.0
        %441 = vmatprep.subr.mxu0 0.0
        %442 = vmatpush1.msra.mxu0 0.0
        %443 = vmatprep.subr.mxu0 0.0
        %444 = vmatpush1.msra.mxu0 0.0
        %445 = vmatprep.subr.mxu0 0.0
        %446 = vmatpush1.msra.mxu0 0.0
        %447 = vmatprep.subr.mxu0 0.0
        %448 = vmatpush1.msra.mxu0 0.0
        %449 = vmatprep.subr.mxu0 0.0
        %450 = vmatpush1.msra.mxu0 0.0
        %451 = vmatprep.subr.mxu0 0.0
        %452 = vmatpush1.msra.mxu0 0.0
        %453 = vmatprep.subr.mxu0 0.0
        %454 = vmatpush1.msra.mxu0 0.0
        %455 = vmatprep.mubr.f32.mxu0 0.0
        %456 = vmatmul.mubr.f32.gmra.mrb[0].mxu0 %v389
        %v457 = vpop.f32.mrb[0].mxu0
        %v458 = vadd.f32 0.0, %v457
        %v459 = vpop.f32.mrb[0].mxu0
        %v460 = vadd.f32 0.0, %v459
        %461 = vdwg.mxu0
        %v462 = vadd.f32 %v458, %v460
        %463 = vadd.xlane.f32.xlu0 %v462
        %v464 = vpop.xlane.xlu0 %463
        %v465 = vmul.f32 %v458, %v458
        %v466 = vmul.f32 %v460, %v460
        %v467 = vadd.f32 %v465, %v466
        %468 = vadd.xlane.f32.xlu0 %v467
        %v469 = vpop.xlane.xlu0 %468
        %v470 = vmul.f32 %v464, 0.00390625
        %v471 = vmul.f32 %v469, 0.00390625
        %v472 = vmul.f32 %v470, %v470
        %v473 = vsub.f32 %v471, %v472
        %v474 = vsub.f32 %v458, %v470
        %v475 = vsub.f32 %v460, %v470
        %v476 = vadd.f32 %v473, 1e-05
        %v477 = vrsqrt.pop %v476
        %v478 = vmul.f32 %v474, %v477
        %v479 = vmul.f32 %v475, %v477
        %vm480 = vcmp.gt.f32.partialorder %v478, 0.0
        %vm481 = vcmp.gt.f32.partialorder %v479, 0.0
        %v482 = vmul.f32 %v478, 0.2
        %v483 = vmul.f32 %v479, 0.2
        %v484 = vsel %vm480, %v478, %v482
        %v485 = vsel %vm481, %v479, %v483
        %v486 = vadd.f32 %v247, %v484
        %v487 = vadd.f32 %v248, %v485
        %488 = vrot.lane.b32.xlu0 %v486, 17
        %v489 = vpop.permute.xlu0 %488
        %490 = vrot.lane.b32.xlu0 %v487, 17
        %v491 = vpop.permute.xlu0 %490
        %v492 = vsel %vm255, %v489, %v491
        %v493 = vsel %vm255, %v491, %v489
        %v494 = vmul.f32 %v493, %v261
        %v495 = vmul.f32 %v492, %v265
        %496 = vrot.lane.b32.xlu0 %v486, 16
        %v497 = vpop.permute.xlu0 %496
        %498 = vrot.lane.b32.xlu0 %v487, 16
        %v499 = vpop.permute.xlu0 %498
        %v500 = vsel %vm272, %v497, %v499
        %v501 = vsel %vm272, %v499, %v497
        %v502 = vmul.f32 %v501, %v278
        %v503 = vmul.f32 %v500, %v282
        %504 = vrot.lane.b32.xlu0 %v486, 15
        %v505 = vpop.permute.xlu0 %504
        %506 = vrot.lane.b32.xlu0 %v487, 15
        %v507 = vpop.permute.xlu0 %506
        %v508 = vsel %vm289, %v505, %v507
        %v509 = vsel %vm289, %v507, %v505
        %v510 = vmul.f32 %v509, %v295
        %v511 = vmul.f32 %v508, %v299
        %512 = vrot.lane.b32.xlu0 %v486, 1
        %v513 = vpop.permute.xlu0 %512
        %514 = vrot.lane.b32.xlu0 %v487, 1
        %v515 = vpop.permute.xlu0 %514
        %v516 = vsel %vm306, %v513, %v515
        %v517 = vsel %vm306, %v515, %v513
        %v518 = vmul.f32 %v517, %v312
        %v519 = vmul.f32 %v516, %v316
        %520 = vrot.lane.b32.xlu0 %v486, 127
        %v521 = vpop.permute.xlu0 %520
        %522 = vrot.lane.b32.xlu0 %v487, 127
        %v523 = vpop.permute.xlu0 %522
        %v524 = vsel %vm323, %v521, %v523
        %v525 = vsel %vm323, %v523, %v521
        %v526 = vmul.f32 %v524, %v329
        %v527 = vmul.f32 %v525, %v333
        %528 = vrot.lane.b32.xlu0 %v486, 113
        %v529 = vpop.permute.xlu0 %528
        %530 = vrot.lane.b32.xlu0 %v487, 113
        %v531 = vpop.permute.xlu0 %530
        %v532 = vsel %vm340, %v529, %v531
        %v533 = vsel %vm340, %v531, %v529
        %v534 = vmul.f32 %v532, %v346
        %v535 = vmul.f32 %v533, %v350
        %536 = vrot.lane.b32.xlu0 %v486, 112
        %v537 = vpop.permute.xlu0 %536
        %538 = vrot.lane.b32.xlu0 %v487, 112
        %v539 = vpop.permute.xlu0 %538
        %v540 = vsel %vm357, %v537, %v539
        %v541 = vsel %vm357, %v539, %v537
        %v542 = vmul.f32 %v540, %v363
        %v543 = vmul.f32 %v541, %v367
        %544 = vrot.lane.b32.xlu0 %v486, 111
        %v545 = vpop.permute.xlu0 %544
        %546 = vrot.lane.b32.xlu0 %v487, 111
        %v547 = vpop.permute.xlu0 %546
        %v548 = vsel %vm374, %v545, %v547
        %v549 = vsel %vm374, %v547, %v545
        %v550 = vmul.f32 %v548, %v380
        %v551 = vmul.f32 %v549, %v384
        %v553 = vsel %vm387, %v246, 0
        %555 = vmatprep.subr.mxu0 %v495
        %556 = vmatpush1.msra.mxu0 %v494
        %557 = vmatprep.subr.mxu0 %v503
        %558 = vmatpush1.msra.mxu0 %v502
        %559 = vmatprep.subr.mxu0 %v511
        %560 = vmatpush1.msra.mxu0 %v510
        %561 = vmatprep.subr.mxu0 %v519
        %562 = vmatpush1.msra.mxu0 %v518
        %563 = vmatprep.subr.mxu0 %v487
        %564 = vmatpush1.msra.mxu0 %v486
        %565 = vmatprep.subr.mxu0 %v527
        %566 = vmatpush1.msra.mxu0 %v526
        %567 = vmatprep.subr.mxu0 %v535
        %568 = vmatpush1.msra.mxu0 %v534
        %569 = vmatprep.subr.mxu0 %v543
        %570 = vmatpush1.msra.mxu0 %v542
        %571 = vmatprep.subr.mxu0 %v551
        %572 = vmatpush1.msra.mxu0 %v550
        %573 = vmatprep.subr.mxu0 0.0
        %574 = vmatpush1.msra.mxu0 0.0
        %575 = vmatprep.subr.mxu0 0.0
        %576 = vmatpush1.msra.mxu0 0.0
        %577 = vmatprep.subr.mxu0 0.0
        %578 = vmatpush1.msra.mxu0 0.0
        %579 = vmatprep.subr.mxu0 0.0
        %580 = vmatpush1.msra.mxu0 0.0
        %581 = vmatprep.subr.mxu0 0.0
        %582 = vmatpush1.msra.mxu0 0.0
        %583 = vmatprep.subr.mxu0 0.0
        %584 = vmatpush1.msra.mxu0 0.0
        %585 = vmatprep.subr.mxu0 0.0
        %586 = vmatpush1.msra.mxu0 0.0
        %587 = vmatprep.subr.mxu0 0.0
        %588 = vmatpush1.msra.mxu0 0.0
        %589 = vmatprep.subr.mxu0 0.0
        %590 = vmatpush1.msra.mxu0 0.0
        %591 = vmatprep.subr.mxu0 0.0
        %592 = vmatpush1.msra.mxu0 0.0
        %593 = vmatprep.subr.mxu0 0.0
        %594 = vmatpush1.msra.mxu0 0.0
        %595 = vmatprep.subr.mxu0 0.0
        %596 = vmatpush1.msra.mxu0 0.0
        %597 = vmatprep.subr.mxu0 0.0
        %598 = vmatpush1.msra.mxu0 0.0
        %599 = vmatprep.subr.mxu0 0.0
        %600 = vmatpush1.msra.mxu0 0.0
        %601 = vmatprep.subr.mxu0 0.0
        %602 = vmatpush1.msra.mxu0 0.0
        %603 = vmatprep.subr.mxu0 0.0
        %604 = vmatpush1.msra.mxu0 0.0
        %605 = vmatprep.subr.mxu0 0.0
        %606 = vmatpush1.msra.mxu0 0.0
        %607 = vmatprep.subr.mxu0 0.0
        %608 = vmatpush1.msra.mxu0 0.0
        %609 = vmatprep.subr.mxu0 0.0
        %610 = vmatpush1.msra.mxu0 0.0
        %611 = vmatprep.subr.mxu0 0.0
        %612 = vmatpush1.msra.mxu0 0.0
        %613 = vmatprep.subr.mxu0 0.0
        %614 = vmatpush1.msra.mxu0 0.0
        %615 = vmatprep.subr.mxu0 0.0
        %616 = vmatpush1.msra.mxu0 0.0
        %617 = vmatprep.subr.mxu0 0.0
        %618 = vmatpush1.msra.mxu0 0.0
        %619 = vmatprep.mubr.f32.mxu0 0.0
        %620 = vmatmul.mubr.f32.gmra.mrb[0].mxu0 %v553
        %v621 = vpop.f32.mrb[0].mxu0
        %v622 = vadd.f32 0.0, %v621
        %v623 = vpop.f32.mrb[0].mxu0
        %v624 = vadd.f32 0.0, %v623
        %625 = vdwg.mxu0
        %v626 = vadd.f32 %v622, %v624
        %627 = vadd.xlane.f32.xlu0 %v626
        %v628 = vpop.xlane.xlu0 %627
        %v629 = vmul.f32 %v622, %v622
        %v630 = vmul.f32 %v624, %v624
        %v631 = vadd.f32 %v629, %v630
        %632 = vadd.xlane.f32.xlu0 %v631
        %v633 = vpop.xlane.xlu0 %632
        %v634 = vmul.f32 %v628, 0.00390625
        %v635 = vmul.f32 %v633, 0.00390625
        %v636 = vmul.f32 %v634, %v634
        %v637 = vsub.f32 %v635, %v636
        %v638 = vsub.f32 %v622, %v634
        %v639 = vsub.f32 %v624, %v634
        %v640 = vadd.f32 %v637, 1e-05
        %v641 = vrsqrt.pop %v640
        %v642 = vmul.f32 %v638, %v641
        %v643 = vmul.f32 %v639, %v641
        %vm644 = vcmp.gt.f32.partialorder %v642, 0.0
        %vm645 = vcmp.gt.f32.partialorder %v643, 0.0
        %v646 = vmul.f32 %v642, 0.2
        %v647 = vmul.f32 %v643, 0.2
        %v648 = vsel %vm644, %v642, %v646
        %v649 = vsel %vm645, %v643, %v647
        %v650 = vadd.f32 %v247, %v648
        %v651 = vadd.f32 %v248, %v649
        %652 = vst [vmem:[%s240] sm:$0xff] %v650
        %653 = vst [vmem:[%s240 + $0x8] sm:$0xff] %v651
        %s654 = sand.u32 %s119, 1
        %s655 = scalar_lea.sflag [#allocation4], %s654
        %s656 = sand.u32 %s119, 1
        %s657 = smul.addr %s656, 16
        %s658 = scalar_lea.vmem [#allocation8], %s657
        // Predicated region
        $region49: #{tpu_custom_call.1} parent=35 // pred_check
          %p659 = pneg %p129
        $region50: #{tpu_custom_call.1} parent=35 // pred_check_branch
          %661 = sbr.rel (%p659) target = $region52
        $region51: #{tpu_custom_call.1} parent=35 // pred_region
          %s663 = ssub.s32 256, 256
          %664 = vsyncadd %s655, %s663
          %s665 = smul.addr %s22, 2
          %s666 = smul.addr %s665, 128
          %s667 = scalar_lea.hbm %s4, %s666
          %s669 = sshll.u32 %s658, 4
          %s670 = int_to_ptr.vmem [resolvable:$true] %s669
          %672 = dma.vmem_to_hbm [thread:$0]  %s670, 256, %s667, %s655
        $region52: #{tpu_custom_call.1} parent=35 // pred_fallthru
          _
      $region36: #{tpu_custom_call.1} parent=5 // pred_fallthru
        _
      %p673 = scmp.le.s32.totalorder 2, %s17
      // Predicated region
      $region53: #{tpu_custom_call.1} parent=5 // pred_check
        %p674 = pneg %p673
      $region54: #{tpu_custom_call.1} parent=5 // pred_check_branch
        %676 = sbr.rel (%p674) target = $region56
      $region55: #{tpu_custom_call.1} parent=5 // pred_region
        %s677 = ssub.s32 %s17, 2
        // Predicated region
        $region57: #{tpu_custom_call.1} parent=55 // pred_check
          %p678 = pneg %p135
        $region58: #{tpu_custom_call.1} parent=55 // pred_check_branch
          %680 = sbr.rel (%p678) target = $region60
        $region59: #{tpu_custom_call.1} parent=55 // pred_region
          %s681 = sand.u32 %s120, 1
          %s682 = scalar_lea.sflag [#allocation4], %s681
          %s683 = sand.u32 %s120, 1
          %s684 = smul.addr %s683, 16
          %s685 = scalar_lea.vmem [#allocation8], %s684
          %686 = dma.done %s682, 256
        $region60: #{tpu_custom_call.1} parent=55 // pred_fallthru
          _
      $region56: #{tpu_custom_call.1} parent=5 // pred_fallthru
        _
    $region6: #{tpu_custom_call.1} parent=1 // loop_footer
      %s21 = sadd.s32 1, %s17
    $region7: #{tpu_custom_call.1} parent=1 // loop_footer_branch
      %16 = sbr.rel target = $region3
    $region8: #{tpu_custom_call.1} parent=1 // loop_exit
      _
    %687 = vsyncpa [#allocation3], 1
    %s688 = scalar_lea.sflag [#allocation3], 1
    %689 = vsyncpa %s688, 1
    %690 = vsyncpa [#allocation6], 1
    %691 = vsyncpa [#allocation4], 1
    %s692 = scalar_lea.sflag [#allocation4], 1
    %693 = vsyncpa %s692, 1

</llo_original>
